<compile_context>
chip_gen: v7x
topology: tpu7x:2x2x1
jax: 0.10.0
libtpu: 0.0.40
codegen_flags: <defaults>
</compile_context>

<pallas_src>
import jax
import jax.numpy as jnp
from jax.experimental import pallas as pl
from jax.experimental.pallas import tpu as pltpu

IN_DIM = 20
HID_DIM = 50
OUT_DIM = 10
HID_PAD = 128   # hidden padded to lane width (VMEM-resident, negligible cost)
OUT_PAD = 16    # output padded only to a sublane multiple -> 8x less HBM write


def _round_up(n, m):
    return ((n + m - 1) // m) * m


def _mlp_kernel(x_ref, w1_ref, b1_ref, w2_ref, b2_ref, o_ref):
    # Cast x to the MXU input dtype in-kernel (free on the VPU; saves a
    # wrapper-side convert pass over x in HBM).
    x = x_ref[...].astype(w1_ref.dtype)
    # fc1: MXU matmul with f32 accumulation, bias + ReLU in f32 on the VPU.
    h = jnp.dot(x, w1_ref[...], preferred_element_type=jnp.float32)
    h = jnp.maximum(h + b1_ref[...], 0.0)
    # fc2: feed the MXU in the weight dtype (bf16 on the fast path), f32 acc.
    y = jnp.dot(h.astype(w2_ref.dtype), w2_ref[...],
                preferred_element_type=jnp.float32)
    o_ref[...] = (y + b2_ref[...]).astype(o_ref.dtype)


def prepare_params(w1, b1, w2, b2, *, use_bf16=True):
    """Pad + cast the parameters once (hoisted out of the per-call path).

    w1: (20, 50) = fc1.weight.T, b1: (50,)
    w2: (50, 10) = fc2.weight.T, b2: (10,)
    Padded hidden columns give relu(0 + 0) = 0 and padded W2 rows/cols are
    zero, so the sliced [:, :10] result is unchanged.
    """
    mat_dtype = jnp.bfloat16 if use_bf16 else jnp.float32
    w1p = jnp.zeros((IN_DIM, HID_PAD), jnp.float32).at[:, :HID_DIM].set(w1)
    b1p = jnp.zeros((1, HID_PAD), jnp.float32).at[:, :HID_DIM].set(
        b1.reshape(1, -1))
    w2p = jnp.zeros((HID_PAD, OUT_PAD), jnp.float32).at[:HID_DIM, :OUT_DIM].set(w2)
    b2p = jnp.zeros((1, OUT_PAD), jnp.float32).at[:, :OUT_DIM].set(
        b2.reshape(1, -1))
    # Biases stay f32: they are added to the f32 MXU accumulator.
    return (w1p.astype(mat_dtype), b1p, w2p.astype(mat_dtype), b2p)


def simple_mlp(x, params, *, tb=2048):
    """Fused MLP forward.  x: (B, 20) float32 -> (B, 10) float32."""
    w1p, b1p, w2p, b2p = params
    B = x.shape[0]
    out_dtype = jnp.float32

    # Batch tiling: TB a multiple of 16 (bf16 sublane packing).
    B16 = _round_up(B, 16)
    TB = min(tb, B16)
    # When the batch allows, keep >= 2 grid steps so ("parallel",) can shard
    # the batch axis across both v7x TensorCores.
    if B16 >= 32:
        TB = min(TB, _round_up((B16 + 1) // 2, 16))
    B_pad = _round_up(B, TB)
    x_in = x
    if B_pad != B:
        x_in = jnp.pad(x_in, ((0, B_pad - B), (0, 0)))
    grid = (B_pad // TB,)

    flops = 2 * B_pad * (IN_DIM * HID_PAD + HID_PAD * OUT_PAD)
    bytes_accessed = (
        x_in.size * x_in.dtype.itemsize
        + B_pad * OUT_PAD * jnp.dtype(out_dtype).itemsize
        + w1p.size * w1p.dtype.itemsize
        + w2p.size * w2p.dtype.itemsize
        + (b1p.size + b2p.size) * 4)

    out = pl.pallas_call(
        _mlp_kernel,
        out_shape=jax.ShapeDtypeStruct((B_pad, OUT_PAD), out_dtype),
        grid=grid,
        in_specs=[
            # x streamed over the batch grid axis (double-buffered DMA).
            pl.BlockSpec((TB, IN_DIM), lambda i: (i, 0)),
            # Weights / biases: constant index map -> VMEM-resident.
            pl.BlockSpec((IN_DIM, HID_PAD), lambda i: (0, 0)),
            pl.BlockSpec((1, HID_PAD), lambda i: (0, 0)),
            pl.BlockSpec((HID_PAD, OUT_PAD), lambda i: (0, 0)),
            pl.BlockSpec((1, OUT_PAD), lambda i: (0, 0)),
        ],
        out_specs=pl.BlockSpec((TB, OUT_PAD), lambda i: (i, 0)),
        compiler_params=pltpu.CompilerParams(
            dimension_semantics=("parallel",)),
        cost_estimate=pl.CostEstimate(
            flops=flops, transcendentals=0, bytes_accessed=bytes_accessed),
    )(x_in, w1p, b1p, w2p, b2p)

    # Output is only 16 lanes wide now, so this slice is cheap; under jit with
    # a consumer it fuses away entirely.
    return out[:B, :OUT_DIM]


# Jitted entry point (tb static so tiling is resolved at trace time).
simple_mlp_jit = jax.jit(simple_mlp, static_argnames=("tb",))


def init_params(key):
    """Deterministic init mimicking nn.Linear's uniform(-1/sqrt(fan_in), ...)."""
    k1, k2, k3, k4 = jax.random.split(key, 4)
    bound1 = 1.0 / jnp.sqrt(IN_DIM)
    bound2 = 1.0 / jnp.sqrt(HID_DIM)
    w1 = jax.random.uniform(k1, (IN_DIM, HID_DIM), jnp.float32, -bound1, bound1)
    b1 = jax.random.uniform(k2, (HID_DIM,), jnp.float32, -bound1, bound1)
    w2 = jax.random.uniform(k3, (HID_DIM, OUT_DIM), jnp.float32, -bound2, bound2)
    b2 = jax.random.uniform(k4, (OUT_DIM,), jnp.float32, -bound2, bound2)
    return w1, b1, w2, b2


def _ref_f32(x, w1, b1, w2, b2):
    """Pure-JAX f32 reference of the PyTorch forward (highest matmul precision)."""
    h = jnp.maximum(jnp.dot(x, w1, precision="highest") + b1, 0.0)
    return jnp.dot(h, w2, precision="highest") + b2


def _ref_bf16(x, w1, b1, w2, b2):
    """Reference emulating the kernel's bf16 MXU inputs with f32 accumulation."""
    f32 = jnp.float32
    xb = x.astype(jnp.bfloat16).astype(f32)
    w1b = w1.astype(jnp.bfloat16).astype(f32)
    h = jnp.maximum(jnp.dot(xb, w1b, precision="highest") + b1, 0.0)
    hb = h.astype(jnp.bfloat16).astype(f32)
    w2b = w2.astype(jnp.bfloat16).astype(f32)
    return jnp.dot(hb, w2b, precision="highest") + b2


if __name__ == "__main__":
    key = jax.random.PRNGKey(0)
    k_x, k_x2, k_p = jax.random.split(key, 3)
    w1, b1, w2, b2 = init_params(k_p)

    params_bf16 = prepare_params(w1, b1, w2, b2, use_bf16=True)
    params_f32 = prepare_params(w1, b1, w2, b2, use_bf16=False)

    # --- small batch (single grid step) ---
    batch = 8
    x = jax.random.normal(k_x, (batch, IN_DIM), jnp.float32)
    ref32 = _ref_f32(x, w1, b1, w2, b2)
    ref16 = _ref_bf16(x, w1, b1, w2, b2)

    out_bf16 = jax.block_until_ready(simple_mlp_jit(x, params_bf16))
    assert out_bf16.shape == (batch, OUT_DIM)
    assert jnp.allclose(out_bf16, ref16, atol=1e-4, rtol=1e-4)
    assert jnp.allclose(out_bf16, ref32, atol=5e-2, rtol=5e-2)

    out_f32 = jax.block_until_ready(simple_mlp_jit(x, params_f32))
    assert out_f32.shape == (batch, OUT_DIM)
    assert jnp.allclose(out_f32, ref32, atol=2e-2, rtol=2e-2)

    # --- batch that is not a tile multiple (exercises >= 2 grid steps + padding) ---
    batch2 = 40
    x2 = jax.random.normal(k_x2, (batch2, IN_DIM), jnp.float32)
    ref32_2 = _ref_f32(x2, w1, b1, w2, b2)
    ref16_2 = _ref_bf16(x2, w1, b1, w2, b2)

    out2 = jax.block_until_ready(simple_mlp_jit(x2, params_bf16))
    assert out2.shape == (batch2, OUT_DIM)
    assert jnp.allclose(out2, ref16_2, atol=1e-4, rtol=1e-4)
    assert jnp.allclose(out2, ref32_2, atol=5e-2, rtol=5e-2)

    print("KERNEL_OK")
</pallas_src>

<mosaic_0001>
module attributes {stable_mosaic.version = 11 : i64} {
  func.func @_mlp_kernel(%arg0: i32, %arg1: memref<16x20xf32, #tpu.memory_space<vmem>>, %arg2: memref<20x128xbf16, #tpu.memory_space<vmem>>, %arg3: memref<1x128xf32, #tpu.memory_space<vmem>>, %arg4: memref<128x16xbf16, #tpu.memory_space<vmem>>, %arg5: memref<1x16xf32, #tpu.memory_space<vmem>>, %arg6: memref<16x16xf32, #tpu.memory_space<vmem>>) attributes {dimension_semantics = [#tpu.dimension_semantics<parallel>], iteration_bounds = array<i64: 1>, scalar_prefetch = 0 : i64, scratch_operands = 0 : i64, tpu.core_type = #tpu.core_type<tc>, window_params = [{transform_indices = @transform_0, window_bounds = array<i64: 16, 20>}, {pipeline_mode = #tpu.pipeline_mode<synchronous>, transform_indices = @transform_1, window_bounds = array<i64: 20, 128>}, {pipeline_mode = #tpu.pipeline_mode<synchronous>, transform_indices = @transform_2, window_bounds = array<i64: 1, 128>}, {pipeline_mode = #tpu.pipeline_mode<synchronous>, transform_indices = @transform_3, window_bounds = array<i64: 128, 16>}, {pipeline_mode = #tpu.pipeline_mode<synchronous>, transform_indices = @transform_4, window_bounds = array<i64: 1, 16>}, {transform_indices = @transform_5, window_bounds = array<i64: 16, 16>}]} {
    %c0 = arith.constant 0 : index
    %c0_0 = arith.constant 0 : index
    %0 = vector.load %arg1[%c0, %c0_0] : memref<16x20xf32, #tpu.memory_space<vmem>>, vector<16x20xf32>
    %1 = arith.truncf %0 : vector<16x20xf32> to vector<16x20xbf16>
    %c0_1 = arith.constant 0 : index
    %c0_2 = arith.constant 0 : index
    %2 = vector.load %arg2[%c0_1, %c0_2] : memref<20x128xbf16, #tpu.memory_space<vmem>>, vector<20x128xbf16>
    %cst = arith.constant dense<0.000000e+00> : vector<16x128xf32>
    %3 = tpu.matmul %1, %2, %cst {dimension_numbers = #tpu.dot_dimension_numbers<[1], [0], [0], [1], [0, 0, 1, 1], [], []>} : vector<16x20xbf16>, vector<20x128xbf16>, vector<16x128xf32> -> vector<16x128xf32>
    %c0_3 = arith.constant 0 : index
    %c0_4 = arith.constant 0 : index
    %4 = vector.load %arg3[%c0_3, %c0_4] : memref<1x128xf32, #tpu.memory_space<vmem>>, vector<1x128xf32>
    %5 = vector.broadcast %4 : vector<1x128xf32> to vector<16x128xf32>
    %6 = arith.addf %3, %5 : vector<16x128xf32>
    %cst_5 = arith.constant 0.000000e+00 : f32
    %7 = vector.broadcast %cst_5 : f32 to vector<16x128xf32>
    %8 = arith.maximumf %6, %7 : vector<16x128xf32>
    %9 = arith.truncf %8 : vector<16x128xf32> to vector<16x128xbf16>
    %c0_6 = arith.constant 0 : index
    %c0_7 = arith.constant 0 : index
    %10 = vector.load %arg4[%c0_6, %c0_7] : memref<128x16xbf16, #tpu.memory_space<vmem>>, vector<128x16xbf16>
    %cst_8 = arith.constant dense<0.000000e+00> : vector<16x16xf32>
    %11 = tpu.matmul %9, %10, %cst_8 {dimension_numbers = #tpu.dot_dimension_numbers<[1], [0], [0], [1], [0, 0, 1, 1], [], []>} : vector<16x128xbf16>, vector<128x16xbf16>, vector<16x16xf32> -> vector<16x16xf32>
    %c0_9 = arith.constant 0 : index
    %c0_10 = arith.constant 0 : index
    %12 = vector.load %arg5[%c0_9, %c0_10] : memref<1x16xf32, #tpu.memory_space<vmem>>, vector<1x16xf32>
    %13 = vector.broadcast %12 : vector<1x16xf32> to vector<16x16xf32>
    %14 = arith.addf %11, %13 : vector<16x16xf32>
    %c0_11 = arith.constant 0 : index
    %c0_12 = arith.constant 0 : index
    %15 = vector.load %arg6[%c0_11, %c0_12] : memref<16x16xf32, #tpu.memory_space<vmem>>, vector<16x16xf32>
    tpu.vector_store %arg6[%c0_11, %c0_12], %14 {strides = array<i32>} : memref<16x16xf32, #tpu.memory_space<vmem>>, vector<16x16xf32>,
    return
  }
  func.func @transform_0(%arg0: i32) -> (i32, i32) {
    %c0_i32 = arith.constant 0 : i32
    %c0_i32_0 = arith.constant 0 : i32
    return %arg0, %c0_i32 : i32, i32
  }
  func.func @transform_1(%arg0: i32) -> (i32, i32) {
    %c0_i32 = arith.constant 0 : i32
    %c0_i32_0 = arith.constant 0 : i32
    %c0_i32_1 = arith.constant 0 : i32
    return %c0_i32, %c0_i32_0 : i32, i32
  }
  func.func @transform_2(%arg0: i32) -> (i32, i32) {
    %c0_i32 = arith.constant 0 : i32
    %c0_i32_0 = arith.constant 0 : i32
    %c0_i32_1 = arith.constant 0 : i32
    return %c0_i32, %c0_i32_0 : i32, i32
  }
  func.func @transform_3(%arg0: i32) -> (i32, i32) {
    %c0_i32 = arith.constant 0 : i32
    %c0_i32_0 = arith.constant 0 : i32
    %c0_i32_1 = arith.constant 0 : i32
    return %c0_i32, %c0_i32_0 : i32, i32
  }
  func.func @transform_4(%arg0: i32) -> (i32, i32) {
    %c0_i32 = arith.constant 0 : i32
    %c0_i32_0 = arith.constant 0 : i32
    %c0_i32_1 = arith.constant 0 : i32
    return %c0_i32, %c0_i32_0 : i32, i32
  }
  func.func @transform_5(%arg0: i32) -> (i32, i32) {
    %c0_i32 = arith.constant 0 : i32
    %c0_i32_0 = arith.constant 0 : i32
    return %arg0, %c0_i32 : i32, i32
  }
}

</mosaic_0001>

<llo_original>
// kernel: simple_mlp.1
$region0: #{simple_mlp.1}
  #allocation0 [shape = 'u32[]', space=smem, size = 0x4, offset = 0x4, fixed_abs, tag = 'smem constant byte address 0x4 - core index']
  #allocation1 [shape = 'u32[144,128]{1,0:T(1,128)}', space=vmem, size = 0x12000, scoped, tag = 'internal scratch']
  %s0 = inlined_call_operand.vmem [shape: f32[16,20], index: 0, kind: input, shape index: {}]
  %s1 = inlined_call_operand.vmem [shape: bf16[20,128], index: 1, kind: input, shape index: {}]
  %s2 = inlined_call_operand.vmem [shape: f32[1,128], index: 2, kind: input, shape index: {}]
  %s3 = inlined_call_operand.vmem [shape: bf16[128,16], index: 3, kind: input, shape index: {}]
  %s4 = inlined_call_operand.vmem [shape: f32[1,16], index: 4, kind: input, shape index: {}]
  %s5 = inlined_call_operand.vmem [shape: f32[16,16], index: 5, kind: output, shape index: {}]
  %s6 = sld [smem:[#allocation0]]
  $region30: #{simple_mlp.1} parent=0
    _
  %s8 = ssub.s32 1, %s6
  %s9 = scalar_select 0, %s8, %s6
  // Predicated region
  $region2: #{simple_mlp.1} parent=0 // pred_check
    _
  $region3: #{simple_mlp.1} parent=0 // pred_check_branch
    %11 = sbr.rel (0) target = $region5
  $region4: #{simple_mlp.1} parent=0 // pred_region
    _
  $region5: #{simple_mlp.1} parent=0 // pred_fallthru
    _
  // Predicated region
  $region6: #{simple_mlp.1} parent=0 // pred_check
    _
  $region7: #{simple_mlp.1} parent=0 // pred_check_branch
    %13 = sbr.rel (0) target = $region9
  $region8: #{simple_mlp.1} parent=0 // pred_region
    _
  $region9: #{simple_mlp.1} parent=0 // pred_fallthru
    _
  // Predicated region
  $region10: #{simple_mlp.1} parent=0 // pred_check
    _
  $region11: #{simple_mlp.1} parent=0 // pred_check_branch
    %15 = sbr.rel (0) target = $region13
  $region12: #{simple_mlp.1} parent=0 // pred_region
    _
  $region13: #{simple_mlp.1} parent=0 // pred_fallthru
    _
  // Predicated region
  $region14: #{simple_mlp.1} parent=0 // pred_check
    _
  $region15: #{simple_mlp.1} parent=0 // pred_check_branch
    %17 = sbr.rel (0) target = $region17
  $region16: #{simple_mlp.1} parent=0 // pred_region
    _
  $region17: #{simple_mlp.1} parent=0 // pred_fallthru
    _
  // Predicated region
  $region18: #{simple_mlp.1} parent=0 // pred_check
    _
  $region19: #{simple_mlp.1} parent=0 // pred_check_branch
    %19 = sbr.rel (0) target = $region21
  $region20: #{simple_mlp.1} parent=0 // pred_region
    _
  $region21: #{simple_mlp.1} parent=0 // pred_fallthru
    _
  %v21 = vld [vmem:[%s0] sm:$0xff]
  %v22 = vld [vmem:[%s0 + $0x8] sm:$0xff]
  %v23 = vpack.c.bf16 %v22, %v21
  %v24 = vld [vmem:[%s1] sm:$0xf]
  %v25 = vld [vmem:[%s1 + $0x4] sm:$0xf]
  %v26 = vld [vmem:[%s1 + $0x8] sm:$0x3]
  %v27 = vld [vmem:[%s2] sm:$0x1]
  %v29 = vlaneseq
  %v30 = vshrl.u32 %v29, 7
  %v31 = vsub.s32 0, %v30
  %v32 = vrot.slane %v27, %v31
  %v37 = vunpack.c.l.b16 %v24
  %v38 = vunpack.c.l.b16 %v25
  %v39 = vunpack.c.l.b16 %v26
  %v40 = vpack.c.b16 %v38, %v37
  %v41 = vpack.c.b16 %v39, %v39
  %vm43 = vcmask 162816
  %v45 = vsel %vm43, %v23, 0
  %vm47 = vcmask 1041408
  %v49 = vsel %vm47, %v41, 0
  %51 = vmatprep.subr.bf16.mxu0 0
  %52 = vmatpush1.bf16.msra.mxu0 %v40
  %53 = vmatprep.subr.bf16.mxu0 0
  %54 = vmatpush1.bf16.msra.mxu0 %v49
  %55 = vmatprep.subr.bf16.mxu0 0
  %56 = vmatpush1.bf16.msra.mxu0 0
  %57 = vmatprep.subr.bf16.mxu0 0
  %58 = vmatpush1.bf16.msra.mxu0 0
  %59 = vmatprep.subr.bf16.mxu0 0
  %60 = vmatpush1.bf16.msra.mxu0 0
  %61 = vmatprep.subr.bf16.mxu0 0
  %62 = vmatpush1.bf16.msra.mxu0 0
  %63 = vmatprep.subr.bf16.mxu0 0
  %64 = vmatpush1.bf16.msra.mxu0 0
  %65 = vmatprep.subr.bf16.mxu0 0
  %66 = vmatpush1.bf16.msra.mxu0 0
  %67 = vmatprep.subr.bf16.mxu0 0
  %68 = vmatpush1.bf16.msra.mxu0 0
  %69 = vmatprep.subr.bf16.mxu0 0
  %70 = vmatpush1.bf16.msra.mxu0 0
  %71 = vmatprep.subr.bf16.mxu0 0
  %72 = vmatpush1.bf16.msra.mxu0 0
  %73 = vmatprep.subr.bf16.mxu0 0
  %74 = vmatpush1.bf16.msra.mxu0 0
  %75 = vmatprep.subr.bf16.mxu0 0
  %76 = vmatpush1.bf16.msra.mxu0 0
  %77 = vmatprep.subr.bf16.mxu0 0
  %78 = vmatpush1.bf16.msra.mxu0 0
  %79 = vmatprep.subr.bf16.mxu0 0
  %80 = vmatpush1.bf16.msra.mxu0 0
  %81 = vmatprep.subr.bf16.mxu0 0
  %82 = vmatpush1.bf16.msra.mxu0 0
  %83 = vmatprep.mubr.bf16.mxu0 0
  %84 = vmatmul.mubr.bf16.gmra.mrb[0].mxu0 %v45
  %v85 = vpop.f32.mrb[0].mxu0
  %v86 = vadd.f32 %v32, %v85
  %v87 = vpop.f32.mrb[0].mxu0
  %v88 = vpop.f32.mrb[0].mxu0
  %v89 = vadd.f32 %v32, %v88
  %v90 = vpop.f32.mrb[0].mxu0
  %91 = vdwg.mxu0
  %v92 = vmax.f32 %v86, 0.0
  %v93 = vmax.f32 %v89, 0.0
  %v94 = vpack.c.bf16 %v93, %v92
  %v95 = vld [vmem:[%s3] sm:$0xf]
  %v96 = vld [vmem:[%s3 + $0x4] sm:$0xf]
  %v97 = vld [vmem:[%s3 + $0x8] sm:$0xf]
  %v98 = vld [vmem:[%s3 + $0xc] sm:$0xf]
  %v99 = vld [vmem:[%s3 + $0x10] sm:$0xf]
  %v100 = vld [vmem:[%s3 + $0x14] sm:$0xf]
  %v101 = vld [vmem:[%s3 + $0x18] sm:$0xf]
  %v102 = vld [vmem:[%s3 + $0x1c] sm:$0xf]
  %v103 = vld [vmem:[%s3 + $0x20] sm:$0xf]
  %v104 = vld [vmem:[%s3 + $0x24] sm:$0xf]
  %v105 = vld [vmem:[%s3 + $0x28] sm:$0xf]
  %v106 = vld [vmem:[%s3 + $0x2c] sm:$0xf]
  %v107 = vld [vmem:[%s3 + $0x30] sm:$0xf]
  %v108 = vld [vmem:[%s3 + $0x34] sm:$0xf]
  %v109 = vld [vmem:[%s3 + $0x38] sm:$0xf]
  %v110 = vld [vmem:[%s3 + $0x3c] sm:$0xf]
  %v111 = vld [vmem:[%s4] sm:$0x1]
  %v113 = vlaneseq
  %v114 = vshrl.u32 %v113, 7
  %v115 = vsub.s32 0, %v114
  %v116 = vrot.slane %v111, %v115
  %v134 = vunpack.c.l.b16 %v95
  %v135 = vunpack.c.l.b16 %v96
  %v136 = vunpack.c.l.b16 %v97
  %v137 = vunpack.c.l.b16 %v98
  %v138 = vunpack.c.l.b16 %v99
  %v139 = vunpack.c.l.b16 %v100
  %v140 = vunpack.c.l.b16 %v101
  %v141 = vunpack.c.l.b16 %v102
  %v142 = vunpack.c.l.b16 %v103
  %v143 = vunpack.c.l.b16 %v104
  %v144 = vunpack.c.l.b16 %v105
  %v145 = vunpack.c.l.b16 %v106
  %v146 = vunpack.c.l.b16 %v107
  %v147 = vunpack.c.l.b16 %v108
  %v148 = vunpack.c.l.b16 %v109
  %v149 = vunpack.c.l.b16 %v110
  %v150 = vpack.c.b16 %v135, %v134
  %v151 = vpack.c.b16 %v137, %v136
  %v152 = vpack.c.b16 %v139, %v138
  %v153 = vpack.c.b16 %v141, %v140
  %v154 = vpack.c.b16 %v143, %v142
  %v155 = vpack.c.b16 %v145, %v144
  %v156 = vpack.c.b16 %v147, %v146
  %v157 = vpack.c.b16 %v149, %v148
  %166 = vmatprep.subr.bf16.mxu0 0
  %167 = vmatpush1.bf16.msra.mxu0 %v150
  %168 = vmatprep.subr.bf16.mxu0 0
  %169 = vmatpush1.bf16.msra.mxu0 %v151
  %170 = vmatprep.subr.bf16.mxu0 0
  %171 = vmatpush1.bf16.msra.mxu0 %v152
  %172 = vmatprep.subr.bf16.mxu0 0
  %173 = vmatpush1.bf16.msra.mxu0 %v153
  %174 = vmatprep.subr.bf16.mxu0 0
  %175 = vmatpush1.bf16.msra.mxu0 %v154
  %176 = vmatprep.subr.bf16.mxu0 0
  %177 = vmatpush1.bf16.msra.mxu0 %v155
  %178 = vmatprep.subr.bf16.mxu0 0
  %179 = vmatpush1.bf16.msra.mxu0 %v156
  %180 = vmatprep.subr.bf16.mxu0 0
  %181 = vmatpush1.bf16.msra.mxu0 %v157
  %182 = vmatprep.subr.bf16.mxu0 0
  %183 = vmatpush1.bf16.msra.mxu0 0
  %184 = vmatprep.subr.bf16.mxu0 0
  %185 = vmatpush1.bf16.msra.mxu0 0
  %186 = vmatprep.subr.bf16.mxu0 0
  %187 = vmatpush1.bf16.msra.mxu0 0
  %188 = vmatprep.subr.bf16.mxu0 0
  %189 = vmatpush1.bf16.msra.mxu0 0
  %190 = vmatprep.subr.bf16.mxu0 0
  %191 = vmatpush1.bf16.msra.mxu0 0
  %192 = vmatprep.subr.bf16.mxu0 0
  %193 = vmatpush1.bf16.msra.mxu0 0
  %194 = vmatprep.subr.bf16.mxu0 0
  %195 = vmatpush1.bf16.msra.mxu0 0
  %196 = vmatprep.subr.bf16.mxu0 0
  %197 = vmatpush1.bf16.msra.mxu0 0
  %198 = vmatprep.mubr.bf16.mxu0 0
  %199 = vmatmul.mubr.bf16.gmra.mrb[0].mxu0 %v94
  %v200 = vpop.f32.mrb[0].mxu0
  %v201 = vadd.f32 %v116, %v200
  %v202 = vpop.f32.mrb[0].mxu0
  %v203 = vpop.f32.mrb[0].mxu0
  %v204 = vadd.f32 %v116, %v203
  %v205 = vpop.f32.mrb[0].mxu0
  %206 = vdwg.mxu0
  %vm207 = vcmask 130048
  %208 = vst.msk [vmem:[%s5] sm:$0xff] %vm207, %v201
  %209 = vst.msk [vmem:[%s5 + $0x8] sm:$0xff] %vm207, %v204
  // Predicated region
  $region22: #{simple_mlp.1} parent=0 // pred_check
    _
  $region23: #{simple_mlp.1} parent=0 // pred_check_branch
    %211 = sbr.rel (0) target = $region25
  $region24: #{simple_mlp.1} parent=0 // pred_region
    _
  $region25: #{simple_mlp.1} parent=0 // pred_fallthru
    _
  // Predicated region
  $region26: #{simple_mlp.1} parent=0 // pred_check
    _
  $region27: #{simple_mlp.1} parent=0 // pred_check_branch
    %213 = sbr.rel (0) target = $region29
  $region28: #{simple_mlp.1} parent=0 // pred_region
    _
  $region29: #{simple_mlp.1} parent=0 // pred_fallthru
    _

</llo_original>
